<compile_context>
chip_gen: v7x
topology: tpu7x:2x2x1
jax: 0.10.0
libtpu: 0.0.40
codegen_flags: <defaults>
</compile_context>

<pallas_src>
import jax
import jax.numpy as jnp
from jax.experimental import pallas as pl
from jax.experimental.pallas import tpu as pltpu

LANE = 128


def _round_up(n, m):
    return ((n + m - 1) // m) * m


def mlp_kernel(x_ref, w1_ref, b1_ref, w2_ref, b2_ref, w3_ref, b3_ref, o_ref):
    # Three MXU matmuls with f32 accumulation; bias-add/ReLU epilogue stays in
    # f32 (v5e has no bf16 VALU), downcast only when feeding the next dot.
    cdt = w1_ref.dtype  # compute dtype for matmul operands (f32 or bf16)
    x = x_ref[...].astype(cdt)
    h = jnp.dot(x, w1_ref[...], preferred_element_type=jnp.float32) + b1_ref[...]
    h = jnp.maximum(h, 0.0).astype(cdt)
    h = jnp.dot(h, w2_ref[...], preferred_element_type=jnp.float32) + b2_ref[...]
    h = jnp.maximum(h, 0.0).astype(cdt)
    out = jnp.dot(h, w3_ref[...], preferred_element_type=jnp.float32) + b3_ref[...]
    o_ref[...] = out.astype(o_ref.dtype)


def mlp_forward(x, w1, b1, w2, b2, w3, b3, *, block_b=8192, out_dtype=None):
    """Forward pass of the 10->20->20->4 ReLU MLP via one pallas_call."""
    B, D_IN = x.shape
    D_H1 = w1.shape[1]
    D_H2 = w2.shape[1]
    D_OUT = w3.shape[1]
    if out_dtype is None:
        out_dtype = x.dtype

    # --- compute dtype: bf16 only if the caller already stores x in bf16 -----
    # (casting x in the wrapper would be an extra un-fused HBM pass that costs
    # more than it saves). Weights are tiny, so casting them is negligible.
    compute_dtype = jnp.bfloat16 if x.dtype == jnp.bfloat16 else jnp.float32
    w1c = w1.astype(compute_dtype)
    w2c = w2.astype(compute_dtype)
    w3c = w3.astype(compute_dtype)
    b1c = b1.astype(jnp.float32)
    b2c = b2.astype(jnp.float32)
    b3c = b3.astype(jnp.float32)

    # --- batch tiling (no wrapper-side padding; last block is clipped) -------
    block_b = _round_up(max(block_b, 8), 8)
    tb = min(block_b, _round_up(B, 8))
    # Megacore: if a single tile would cover a non-tiny batch, split it so the
    # grid has >= 2 steps and both v7x TensorCores get work.
    if B > 8 and pl.cdiv(B, tb) == 1:
        tb = max(8, _round_up(pl.cdiv(B, 2), 8))
    grid = (pl.cdiv(B, tb),)

    # --- VMEM budget: ~4 KB/row covers x/out double-buffers (lane-padded to
    # 128 in VMEM) plus (tb, 20) intermediates; keep under v7x's 64 MiB. ------
    vmem_limit = int(min(100 * 2**20, max(32 * 2**20, tb * 4096 + 4 * 2**20)))

    # --- cost estimate: this op is HBM-bound, tell XLA the real byte count ---
    flops = 2 * B * (D_IN * D_H1 + D_H1 * D_H2 + D_H2 * D_OUT)
    bytes_accessed = (
        int(x.size) * x.dtype.itemsize
        + sum(int(a.size) * a.dtype.itemsize
              for a in (w1c, b1c, w2c, b2c, w3c, b3c))
        + B * D_OUT * jnp.dtype(out_dtype).itemsize)
    cost = pl.CostEstimate(flops=flops, transcendentals=0,
                           bytes_accessed=bytes_accessed)

    const = lambda i: (0, 0)  # weights/biases: same block every step -> VMEM-resident

    out = pl.pallas_call(
        mlp_kernel,
        out_shape=jax.ShapeDtypeStruct((B, D_OUT), out_dtype),
        grid=grid,
        in_specs=[
            pl.BlockSpec((tb, D_IN), lambda i: (i, 0)),   # x: tiled over batch
            pl.BlockSpec((D_IN, D_H1), const),            # w1
            pl.BlockSpec((1, D_H1), const),               # b1
            pl.BlockSpec((D_H1, D_H2), const),            # w2
            pl.BlockSpec((1, D_H2), const),               # b2
            pl.BlockSpec((D_H2, D_OUT), const),           # w3
            pl.BlockSpec((1, D_OUT), const),              # b3
        ],
        out_specs=pl.BlockSpec((tb, D_OUT), lambda i: (i, 0)),
        compiler_params=pltpu.CompilerParams(
            dimension_semantics=("parallel",),            # megacore on v7x
            vmem_limit_bytes=vmem_limit,
        ),
        cost_estimate=cost,
    )(x, w1c, b1c, w2c, b2c, w3c, b3c)

    return out


def init_linear_params(key, fan_in, fan_out):
    # Deterministic init mimicking PyTorch nn.Linear default:
    # U(-1/sqrt(fan_in), 1/sqrt(fan_in)) for both weight and bias.
    kw, kb = jax.random.split(key)
    bound = 1.0 / (fan_in ** 0.5)
    w = jax.random.uniform(kw, (fan_in, fan_out), jnp.float32, -bound, bound)
    b = jax.random.uniform(kb, (1, fan_out), jnp.float32, -bound, bound)
    return w, b


def _reference(x, w1, b1, w2, b2, w3, b3):
    h = jnp.maximum(x @ w1 + b1, 0.0)
    h = jnp.maximum(h @ w2 + b2, 0.0)
    return h @ w3 + b3


if __name__ == "__main__":
    key = jax.random.PRNGKey(0)
    k_x, k_x2, k1, k2, k3 = jax.random.split(key, 5)

    w1, b1 = init_linear_params(k1, 10, 20)
    w2, b2 = init_linear_params(k2, 20, 20)
    w3, b3 = init_linear_params(k3, 20, 4)

    # --- small-batch path (single tile, unpadded (B, 4) output) --------------
    batch = 8
    x = jax.random.normal(k_x, (batch, 10), jnp.float32)
    out = jax.block_until_ready(mlp_forward(x, w1, b1, w2, b2, w3, b3))
    ref = _reference(x, w1, b1, w2, b2, w3, b3)
    assert out.shape == (batch, 4)
    assert jnp.allclose(out, ref, atol=1e-5, rtol=1e-5)

    # --- multi-tile path: batch not a multiple of the tile; exercises grid
    #     iteration plus Pallas last-block clipping (no wrapper pad/slice) ----
    batch2 = 200
    x2 = jax.random.normal(k_x2, (batch2, 10), jnp.float32)
    out2 = jax.block_until_ready(
        mlp_forward(x2, w1, b1, w2, b2, w3, b3, block_b=64))
    ref2 = _reference(x2, w1, b1, w2, b2, w3, b3)
    assert out2.shape == (batch2, 4)
    assert jnp.allclose(out2, ref2, atol=1e-5, rtol=1e-5)

    # --- default big-tile path (tile auto-split for a >=2-step grid) ---------
    out3 = jax.block_until_ready(mlp_forward(x2, w1, b1, w2, b2, w3, b3))
    assert out3.shape == (batch2, 4)
    assert jnp.allclose(out3, ref2, atol=1e-5, rtol=1e-5)

    # --- bf16 path: only taken when the caller already holds x in bf16
    #     (here we cast in the test harness to emulate a bf16 producer);
    #     accumulation/bias/ReLU stay f32 in-kernel, output is bf16 ----------
    x2_bf = x2.astype(jnp.bfloat16)
    out_bf = jax.block_until_ready(
        mlp_forward(x2_bf, w1, b1, w2, b2, w3, b3, block_b=64))
    assert out_bf.shape == (batch2, 4)
    assert out_bf.dtype == jnp.bfloat16
    assert jnp.allclose(out_bf.astype(jnp.float32), ref2, atol=5e-2, rtol=5e-2)

    # TODO(synk): backward()/MSELoss/SGD parameter update are training-side ops,
    # not part of the forward pass; not implemented in the kernel.
    print("KERNEL_OK")
</pallas_src>

<mosaic_0001>
module attributes {stable_mosaic.version = 11 : i64} {
  func.func @mlp_kernel(%arg0: i32, %arg1: memref<8x10xf32, #tpu.memory_space<vmem>>, %arg2: memref<10x20xf32, #tpu.memory_space<vmem>>, %arg3: memref<1x20xf32, #tpu.memory_space<vmem>>, %arg4: memref<20x20xf32, #tpu.memory_space<vmem>>, %arg5: memref<1x20xf32, #tpu.memory_space<vmem>>, %arg6: memref<20x4xf32, #tpu.memory_space<vmem>>, %arg7: memref<1x4xf32, #tpu.memory_space<vmem>>, %arg8: memref<8x4xf32, #tpu.memory_space<vmem>>) attributes {dimension_semantics = [#tpu.dimension_semantics<parallel>], iteration_bounds = array<i64: 1>, scalar_prefetch = 0 : i64, scratch_operands = 0 : i64, tpu.core_type = #tpu.core_type<tc>, window_params = [{transform_indices = @transform_0, window_bounds = array<i64: 8, 10>}, {pipeline_mode = #tpu.pipeline_mode<synchronous>, transform_indices = @transform_1, window_bounds = array<i64: 10, 20>}, {pipeline_mode = #tpu.pipeline_mode<synchronous>, transform_indices = @transform_2, window_bounds = array<i64: 1, 20>}, {pipeline_mode = #tpu.pipeline_mode<synchronous>, transform_indices = @transform_3, window_bounds = array<i64: 20, 20>}, {pipeline_mode = #tpu.pipeline_mode<synchronous>, transform_indices = @transform_4, window_bounds = array<i64: 1, 20>}, {pipeline_mode = #tpu.pipeline_mode<synchronous>, transform_indices = @transform_5, window_bounds = array<i64: 20, 4>}, {pipeline_mode = #tpu.pipeline_mode<synchronous>, transform_indices = @transform_6, window_bounds = array<i64: 1, 4>}, {transform_indices = @transform_7, window_bounds = array<i64: 8, 4>}]} {
    %c0 = arith.constant 0 : index
    %c0_0 = arith.constant 0 : index
    %0 = vector.load %arg1[%c0, %c0_0] : memref<8x10xf32, #tpu.memory_space<vmem>>, vector<8x10xf32>
    %c0_1 = arith.constant 0 : index
    %c0_2 = arith.constant 0 : index
    %1 = vector.load %arg2[%c0_1, %c0_2] : memref<10x20xf32, #tpu.memory_space<vmem>>, vector<10x20xf32>
    %cst = arith.constant dense<0.000000e+00> : vector<8x20xf32>
    %2 = tpu.matmul %0, %1, %cst {dimension_numbers = #tpu.dot_dimension_numbers<[1], [0], [0], [1], [0, 0, 1, 1], [], []>} : vector<8x10xf32>, vector<10x20xf32>, vector<8x20xf32> -> vector<8x20xf32>
    %c0_3 = arith.constant 0 : index
    %c0_4 = arith.constant 0 : index
    %3 = vector.load %arg3[%c0_3, %c0_4] : memref<1x20xf32, #tpu.memory_space<vmem>>, vector<1x20xf32>
    %4 = vector.broadcast %3 : vector<1x20xf32> to vector<8x20xf32>
    %5 = arith.addf %2, %4 : vector<8x20xf32>
    %cst_5 = arith.constant 0.000000e+00 : f32
    %6 = vector.broadcast %cst_5 : f32 to vector<8x20xf32>
    %7 = arith.maximumf %5, %6 : vector<8x20xf32>
    %c0_6 = arith.constant 0 : index
    %c0_7 = arith.constant 0 : index
    %8 = vector.load %arg4[%c0_6, %c0_7] : memref<20x20xf32, #tpu.memory_space<vmem>>, vector<20x20xf32>
    %cst_8 = arith.constant dense<0.000000e+00> : vector<8x20xf32>
    %9 = tpu.matmul %7, %8, %cst_8 {dimension_numbers = #tpu.dot_dimension_numbers<[1], [0], [0], [1], [0, 0, 1, 1], [], []>} : vector<8x20xf32>, vector<20x20xf32>, vector<8x20xf32> -> vector<8x20xf32>
    %c0_9 = arith.constant 0 : index
    %c0_10 = arith.constant 0 : index
    %10 = vector.load %arg5[%c0_9, %c0_10] : memref<1x20xf32, #tpu.memory_space<vmem>>, vector<1x20xf32>
    %11 = vector.broadcast %10 : vector<1x20xf32> to vector<8x20xf32>
    %12 = arith.addf %9, %11 : vector<8x20xf32>
    %cst_11 = arith.constant 0.000000e+00 : f32
    %13 = vector.broadcast %cst_11 : f32 to vector<8x20xf32>
    %14 = arith.maximumf %12, %13 : vector<8x20xf32>
    %c0_12 = arith.constant 0 : index
    %c0_13 = arith.constant 0 : index
    %15 = vector.load %arg6[%c0_12, %c0_13] : memref<20x4xf32, #tpu.memory_space<vmem>>, vector<20x4xf32>
    %cst_14 = arith.constant dense<0.000000e+00> : vector<8x4xf32>
    %16 = tpu.matmul %14, %15, %cst_14 {dimension_numbers = #tpu.dot_dimension_numbers<[1], [0], [0], [1], [0, 0, 1, 1], [], []>} : vector<8x20xf32>, vector<20x4xf32>, vector<8x4xf32> -> vector<8x4xf32>
    %c0_15 = arith.constant 0 : index
    %c0_16 = arith.constant 0 : index
    %17 = vector.load %arg7[%c0_15, %c0_16] : memref<1x4xf32, #tpu.memory_space<vmem>>, vector<1x4xf32>
    %18 = vector.broadcast %17 : vector<1x4xf32> to vector<8x4xf32>
    %19 = arith.addf %16, %18 : vector<8x4xf32>
    %c0_17 = arith.constant 0 : index
    %c0_18 = arith.constant 0 : index
    %20 = vector.load %arg8[%c0_17, %c0_18] : memref<8x4xf32, #tpu.memory_space<vmem>>, vector<8x4xf32>
    tpu.vector_store %arg8[%c0_17, %c0_18], %19 {strides = array<i32>} : memref<8x4xf32, #tpu.memory_space<vmem>>, vector<8x4xf32>,
    return
  }
  func.func @transform_0(%arg0: i32) -> (i32, i32) {
    %c0_i32 = arith.constant 0 : i32
    %c0_i32_0 = arith.constant 0 : i32
    return %arg0, %c0_i32 : i32, i32
  }
  func.func @transform_1(%arg0: i32) -> (i32, i32) {
    %c0_i32 = arith.constant 0 : i32
    %c0_i32_0 = arith.constant 0 : i32
    %c0_i32_1 = arith.constant 0 : i32
    return %c0_i32, %c0_i32_0 : i32, i32
  }
  func.func @transform_2(%arg0: i32) -> (i32, i32) {
    %c0_i32 = arith.constant 0 : i32
    %c0_i32_0 = arith.constant 0 : i32
    %c0_i32_1 = arith.constant 0 : i32
    return %c0_i32, %c0_i32_0 : i32, i32
  }
  func.func @transform_3(%arg0: i32) -> (i32, i32) {
    %c0_i32 = arith.constant 0 : i32
    %c0_i32_0 = arith.constant 0 : i32
    %c0_i32_1 = arith.constant 0 : i32
    return %c0_i32, %c0_i32_0 : i32, i32
  }
  func.func @transform_4(%arg0: i32) -> (i32, i32) {
    %c0_i32 = arith.constant 0 : i32
    %c0_i32_0 = arith.constant 0 : i32
    %c0_i32_1 = arith.constant 0 : i32
    return %c0_i32, %c0_i32_0 : i32, i32
  }
  func.func @transform_5(%arg0: i32) -> (i32, i32) {
    %c0_i32 = arith.constant 0 : i32
    %c0_i32_0 = arith.constant 0 : i32
    %c0_i32_1 = arith.constant 0 : i32
    return %c0_i32, %c0_i32_0 : i32, i32
  }
  func.func @transform_6(%arg0: i32) -> (i32, i32) {
    %c0_i32 = arith.constant 0 : i32
    %c0_i32_0 = arith.constant 0 : i32
    %c0_i32_1 = arith.constant 0 : i32
    return %c0_i32, %c0_i32_0 : i32, i32
  }
  func.func @transform_7(%arg0: i32) -> (i32, i32) {
    %c0_i32 = arith.constant 0 : i32
    %c0_i32_0 = arith.constant 0 : i32
    return %arg0, %c0_i32 : i32, i32
  }
}

</mosaic_0001>

<llo_original>
// kernel: tpu_custom_call.1
$region0: #{tpu_custom_call.1}
  #allocation0 [shape = 'u32[]', space=smem, size = 0x4, offset = 0x4, fixed_abs, tag = 'smem constant byte address 0x4 - core index']
  #allocation1 [shape = 'u32[144,128]{1,0:T(1,128)}', space=vmem, size = 0x12000, scoped, tag = 'internal scratch']
  %s0 = inlined_call_operand.vmem [shape: f32[8,10], index: 0, kind: input, shape index: {}]
  %s1 = inlined_call_operand.hbm [shape: f32[10,20], index: 1, kind: input, shape index: {}]
  %s2 = inlined_call_operand.vmem [shape: f32[1,20], index: 2, kind: input, shape index: {}]
  %s3 = inlined_call_operand.vmem [shape: f32[20,20], index: 3, kind: input, shape index: {}]
  %s4 = inlined_call_operand.vmem [shape: f32[1,20], index: 4, kind: input, shape index: {}]
  %s5 = inlined_call_operand.vmem [shape: f32[20,4], index: 5, kind: input, shape index: {}]
  %s6 = inlined_call_operand.vmem [shape: f32[1,4], index: 6, kind: input, shape index: {}]
  %s7 = inlined_call_operand.vmem [shape: f32[8,4], index: 7, kind: output, shape index: {}]
  %s8 = sld [smem:[#allocation0]]
  $region42: #{tpu_custom_call.1} parent=0
    _
  %s10 = ssub.s32 1, %s8
  %s11 = scalar_select 0, %s10, %s8
  $region1: #{tpu_custom_call.1} parent=0
    #allocation2 [shape = 'u8[8192]{0}', space=vmem, size = 0x2000, scoped, tag = 'input window, operand 1, single buffered']
    #allocation3 [shape = 's32[1]{0}', space=sflag, size = 0x4, scoped, tag = 'scoped memory for tpu_custom_call.1']
    %12 = vsyncpa [#allocation3], 0
    // Predicated region
    $region2: #{tpu_custom_call.1} parent=1 // pred_check
      _
    $region3: #{tpu_custom_call.1} parent=1 // pred_check_branch
      %14 = sbr.rel (0) target = $region5
    $region4: #{tpu_custom_call.1} parent=1 // pred_region
      _
    $region5: #{tpu_custom_call.1} parent=1 // pred_fallthru
      _
    // Predicated region
    $region6: #{tpu_custom_call.1} parent=1 // pred_check
      _
    $region7: #{tpu_custom_call.1} parent=1 // pred_check_branch
      %16 = sbr.rel (0) target = $region9
    $region8: #{tpu_custom_call.1} parent=1 // pred_region
      %s18 = ssub.s32 256, 256
      %19 = vsyncadd [#allocation3], %s18
      %s20 = sshll.u32 [#allocation2], 4
      %s21 = int_to_ptr.vmem [resolvable:$true] %s20
      %26 = dma.hbm_to_vmem [thread:$0]  %s1, 256, %s21, [#allocation3], 128, 128, 8
    $region9: #{tpu_custom_call.1} parent=1 // pred_fallthru
      _
    // Predicated region
    $region10: #{tpu_custom_call.1} parent=1 // pred_check
      _
    $region11: #{tpu_custom_call.1} parent=1 // pred_check_branch
      %28 = sbr.rel (0) target = $region13
    $region12: #{tpu_custom_call.1} parent=1 // pred_region
      _
    $region13: #{tpu_custom_call.1} parent=1 // pred_fallthru
      _
    // Predicated region
    $region14: #{tpu_custom_call.1} parent=1 // pred_check
      _
    $region15: #{tpu_custom_call.1} parent=1 // pred_check_branch
      %30 = sbr.rel (0) target = $region17
    $region16: #{tpu_custom_call.1} parent=1 // pred_region
      _
    $region17: #{tpu_custom_call.1} parent=1 // pred_fallthru
      _
    // Predicated region
    $region18: #{tpu_custom_call.1} parent=1 // pred_check
      _
    $region19: #{tpu_custom_call.1} parent=1 // pred_check_branch
      %32 = sbr.rel (0) target = $region21
    $region20: #{tpu_custom_call.1} parent=1 // pred_region
      _
    $region21: #{tpu_custom_call.1} parent=1 // pred_fallthru
      _
    // Predicated region
    $region22: #{tpu_custom_call.1} parent=1 // pred_check
      _
    $region23: #{tpu_custom_call.1} parent=1 // pred_check_branch
      %34 = sbr.rel (0) target = $region25
    $region24: #{tpu_custom_call.1} parent=1 // pred_region
      _
    $region25: #{tpu_custom_call.1} parent=1 // pred_fallthru
      _
    // Predicated region
    $region26: #{tpu_custom_call.1} parent=1 // pred_check
      _
    $region27: #{tpu_custom_call.1} parent=1 // pred_check_branch
      %36 = sbr.rel (0) target = $region29
    $region28: #{tpu_custom_call.1} parent=1 // pred_region
      _
    $region29: #{tpu_custom_call.1} parent=1 // pred_fallthru
      _
    // Predicated region
    $region30: #{tpu_custom_call.1} parent=1 // pred_check
      _
    $region31: #{tpu_custom_call.1} parent=1 // pred_check_branch
      %38 = sbr.rel (0) target = $region33
    $region32: #{tpu_custom_call.1} parent=1 // pred_region
      %39 = dma.done [#allocation3], 256
    $region33: #{tpu_custom_call.1} parent=1 // pred_fallthru
      _
    %v40 = vld [vmem:[%s0] sm:$0xff]
    %v41 = vld [vmem:[#allocation2] sm:$0xff]
    %v42 = vld [vmem:[#allocation2 + $0x8] sm:$0x3]
    %v43 = vld [vmem:[%s2] sm:$0x1]
    %v45 = vlaneseq
    %v46 = vshrl.u32 %v45, 7
    %v47 = vsub.s32 0, %v46
    %v48 = vrot.slane %v43, %v47
    %vm50 = vcmask 80896
    %v52 = vsel %vm50, %v40, 0
    %vm54 = vcmask 1041408
    %v56 = vsel %vm54, %v42, 0
    %58 = vmatprep.subr.mxu0 0.0
    %59 = vmatpush1.msra.mxu0 %v41
    %60 = vmatprep.subr.mxu0 0.0
    %61 = vmatpush1.msra.mxu0 %v56
    %62 = vmatprep.subr.mxu0 0.0
    %63 = vmatpush1.msra.mxu0 0.0
    %64 = vmatprep.subr.mxu0 0.0
    %65 = vmatpush1.msra.mxu0 0.0
    %66 = vmatprep.subr.mxu0 0.0
    %67 = vmatpush1.msra.mxu0 0.0
    %68 = vmatprep.subr.mxu0 0.0
    %69 = vmatpush1.msra.mxu0 0.0
    %70 = vmatprep.subr.mxu0 0.0
    %71 = vmatpush1.msra.mxu0 0.0
    %72 = vmatprep.subr.mxu0 0.0
    %73 = vmatpush1.msra.mxu0 0.0
    %74 = vmatprep.subr.mxu0 0.0
    %75 = vmatpush1.msra.mxu0 0.0
    %76 = vmatprep.subr.mxu0 0.0
    %77 = vmatpush1.msra.mxu0 0.0
    %78 = vmatprep.subr.mxu0 0.0
    %79 = vmatpush1.msra.mxu0 0.0
    %80 = vmatprep.subr.mxu0 0.0
    %81 = vmatpush1.msra.mxu0 0.0
    %82 = vmatprep.subr.mxu0 0.0
    %83 = vmatpush1.msra.mxu0 0.0
    %84 = vmatprep.subr.mxu0 0.0
    %85 = vmatpush1.msra.mxu0 0.0
    %86 = vmatprep.subr.mxu0 0.0
    %87 = vmatpush1.msra.mxu0 0.0
    %88 = vmatprep.subr.mxu0 0.0
    %89 = vmatpush1.msra.mxu0 0.0
    %90 = vmatprep.subr.mxu0 0.0
    %91 = vmatpush1.msra.mxu0 0.0
    %92 = vmatprep.subr.mxu0 0.0
    %93 = vmatpush1.msra.mxu0 0.0
    %94 = vmatprep.subr.mxu0 0.0
    %95 = vmatpush1.msra.mxu0 0.0
    %96 = vmatprep.subr.mxu0 0.0
    %97 = vmatpush1.msra.mxu0 0.0
    %98 = vmatprep.subr.mxu0 0.0
    %99 = vmatpush1.msra.mxu0 0.0
    %100 = vmatprep.subr.mxu0 0.0
    %101 = vmatpush1.msra.mxu0 0.0
    %102 = vmatprep.subr.mxu0 0.0
    %103 = vmatpush1.msra.mxu0 0.0
    %104 = vmatprep.subr.mxu0 0.0
    %105 = vmatpush1.msra.mxu0 0.0
    %106 = vmatprep.subr.mxu0 0.0
    %107 = vmatpush1.msra.mxu0 0.0
    %108 = vmatprep.subr.mxu0 0.0
    %109 = vmatpush1.msra.mxu0 0.0
    %110 = vmatprep.subr.mxu0 0.0
    %111 = vmatpush1.msra.mxu0 0.0
    %112 = vmatprep.subr.mxu0 0.0
    %113 = vmatpush1.msra.mxu0 0.0
    %114 = vmatprep.subr.mxu0 0.0
    %115 = vmatpush1.msra.mxu0 0.0
    %116 = vmatprep.subr.mxu0 0.0
    %117 = vmatpush1.msra.mxu0 0.0
    %118 = vmatprep.subr.mxu0 0.0
    %119 = vmatpush1.msra.mxu0 0.0
    %120 = vmatprep.subr.mxu0 0.0
    %121 = vmatpush1.msra.mxu0 0.0
    %122 = vmatprep.mubr.f32.mxu0 0.0
    %123 = vmatmul.mubr.f32.gmra.mrb[0].mxu0 %v52
    %v124 = vpop.f32.mrb[0].mxu0
    %v125 = vadd.f32 %v48, %v124
    %v126 = vpop.f32.mrb[0].mxu0
    %127 = vdwg.mxu0
    %v128 = vmax.f32 %v125, 0.0
    %v129 = vld [vmem:[%s3] sm:$0xff]
    %v130 = vld [vmem:[%s3 + $0x8] sm:$0xff]
    %v131 = vld [vmem:[%s3 + $0x10] sm:$0xf]
    %v132 = vld [vmem:[%s4] sm:$0x1]
    %v134 = vlaneseq
    %v135 = vshrl.u32 %v134, 7
    %v136 = vsub.s32 0, %v135
    %v137 = vrot.slane %v132, %v136
    %vm139 = vcmask 162816
    %v141 = vsel %vm139, %v128, 0
    %vm143 = vcmask 1043456
    %v145 = vsel %vm143, %v131, 0
    %147 = vmatprep.subr.mxu0 0.0
    %148 = vmatpush1.msra.mxu0 %v129
    %149 = vmatprep.subr.mxu0 0.0
    %150 = vmatpush1.msra.mxu0 %v130
    %151 = vmatprep.subr.mxu0 0.0
    %152 = vmatpush1.msra.mxu0 %v145
    %153 = vmatprep.subr.mxu0 0.0
    %154 = vmatpush1.msra.mxu0 0.0
    %155 = vmatprep.subr.mxu0 0.0
    %156 = vmatpush1.msra.mxu0 0.0
    %157 = vmatprep.subr.mxu0 0.0
    %158 = vmatpush1.msra.mxu0 0.0
    %159 = vmatprep.subr.mxu0 0.0
    %160 = vmatpush1.msra.mxu0 0.0
    %161 = vmatprep.subr.mxu0 0.0
    %162 = vmatpush1.msra.mxu0 0.0
    %163 = vmatprep.subr.mxu0 0.0
    %164 = vmatpush1.msra.mxu0 0.0
    %165 = vmatprep.subr.mxu0 0.0
    %166 = vmatpush1.msra.mxu0 0.0
    %167 = vmatprep.subr.mxu0 0.0
    %168 = vmatpush1.msra.mxu0 0.0
    %169 = vmatprep.subr.mxu0 0.0
    %170 = vmatpush1.msra.mxu0 0.0
    %171 = vmatprep.subr.mxu0 0.0
    %172 = vmatpush1.msra.mxu0 0.0
    %173 = vmatprep.subr.mxu0 0.0
    %174 = vmatpush1.msra.mxu0 0.0
    %175 = vmatprep.subr.mxu0 0.0
    %176 = vmatpush1.msra.mxu0 0.0
    %177 = vmatprep.subr.mxu0 0.0
    %178 = vmatpush1.msra.mxu0 0.0
    %179 = vmatprep.subr.mxu0 0.0
    %180 = vmatpush1.msra.mxu0 0.0
    %181 = vmatprep.subr.mxu0 0.0
    %182 = vmatpush1.msra.mxu0 0.0
    %183 = vmatprep.subr.mxu0 0.0
    %184 = vmatpush1.msra.mxu0 0.0
    %185 = vmatprep.subr.mxu0 0.0
    %186 = vmatpush1.msra.mxu0 0.0
    %187 = vmatprep.subr.mxu0 0.0
    %188 = vmatpush1.msra.mxu0 0.0
    %189 = vmatprep.subr.mxu0 0.0
    %190 = vmatpush1.msra.mxu0 0.0
    %191 = vmatprep.subr.mxu0 0.0
    %192 = vmatpush1.msra.mxu0 0.0
    %193 = vmatprep.subr.mxu0 0.0
    %194 = vmatpush1.msra.mxu0 0.0
    %195 = vmatprep.subr.mxu0 0.0
    %196 = vmatpush1.msra.mxu0 0.0
    %197 = vmatprep.subr.mxu0 0.0
    %198 = vmatpush1.msra.mxu0 0.0
    %199 = vmatprep.subr.mxu0 0.0
    %200 = vmatpush1.msra.mxu0 0.0
    %201 = vmatprep.subr.mxu0 0.0
    %202 = vmatpush1.msra.mxu0 0.0
    %203 = vmatprep.subr.mxu0 0.0
    %204 = vmatpush1.msra.mxu0 0.0
    %205 = vmatprep.subr.mxu0 0.0
    %206 = vmatpush1.msra.mxu0 0.0
    %207 = vmatprep.subr.mxu0 0.0
    %208 = vmatpush1.msra.mxu0 0.0
    %209 = vmatprep.subr.mxu0 0.0
    %210 = vmatpush1.msra.mxu0 0.0
    %211 = vmatprep.mubr.f32.mxu0 0.0
    %212 = vmatmul.mubr.f32.gmra.mrb[0].mxu0 %v141
    %v213 = vpop.f32.mrb[0].mxu0
    %v214 = vadd.f32 %v137, %v213
    %v215 = vpop.f32.mrb[0].mxu0
    %216 = vdwg.mxu0
    %v217 = vmax.f32 %v214, 0.0
    %v218 = vld [vmem:[%s5] sm:$0xff]
    %v219 = vld [vmem:[%s5 + $0x8] sm:$0xff]
    %v220 = vld [vmem:[%s5 + $0x10] sm:$0xf]
    %v221 = vld [vmem:[%s6] sm:$0x1]
    %v223 = vlaneseq
    %v224 = vshrl.u32 %v223, 7
    %v225 = vsub.s32 0, %v224
    %v226 = vrot.slane %v221, %v225
    %v229 = vsel %vm139, %v217, 0
    %v232 = vsel %vm143, %v220, 0
    %234 = vmatprep.subr.mxu0 0.0
    %235 = vmatpush1.msra.mxu0 %v218
    %236 = vmatprep.subr.mxu0 0.0
    %237 = vmatpush1.msra.mxu0 %v219
    %238 = vmatprep.subr.mxu0 0.0
    %239 = vmatpush1.msra.mxu0 %v232
    %240 = vmatprep.subr.mxu0 0.0
    %241 = vmatpush1.msra.mxu0 0.0
    %242 = vmatprep.subr.mxu0 0.0
    %243 = vmatpush1.msra.mxu0 0.0
    %244 = vmatprep.subr.mxu0 0.0
    %245 = vmatpush1.msra.mxu0 0.0
    %246 = vmatprep.subr.mxu0 0.0
    %247 = vmatpush1.msra.mxu0 0.0
    %248 = vmatprep.subr.mxu0 0.0
    %249 = vmatpush1.msra.mxu0 0.0
    %250 = vmatprep.subr.mxu0 0.0
    %251 = vmatpush1.msra.mxu0 0.0
    %252 = vmatprep.subr.mxu0 0.0
    %253 = vmatpush1.msra.mxu0 0.0
    %254 = vmatprep.subr.mxu0 0.0
    %255 = vmatpush1.msra.mxu0 0.0
    %256 = vmatprep.subr.mxu0 0.0
    %257 = vmatpush1.msra.mxu0 0.0
    %258 = vmatprep.subr.mxu0 0.0
    %259 = vmatpush1.msra.mxu0 0.0
    %260 = vmatprep.subr.mxu0 0.0
    %261 = vmatpush1.msra.mxu0 0.0
    %262 = vmatprep.subr.mxu0 0.0
    %263 = vmatpush1.msra.mxu0 0.0
    %264 = vmatprep.subr.mxu0 0.0
    %265 = vmatpush1.msra.mxu0 0.0
    %266 = vmatprep.subr.mxu0 0.0
    %267 = vmatpush1.msra.mxu0 0.0
    %268 = vmatprep.subr.mxu0 0.0
    %269 = vmatpush1.msra.mxu0 0.0
    %270 = vmatprep.subr.mxu0 0.0
    %271 = vmatpush1.msra.mxu0 0.0
    %272 = vmatprep.subr.mxu0 0.0
    %273 = vmatpush1.msra.mxu0 0.0
    %274 = vmatprep.subr.mxu0 0.0
    %275 = vmatpush1.msra.mxu0 0.0
    %276 = vmatprep.subr.mxu0 0.0
    %277 = vmatpush1.msra.mxu0 0.0
    %278 = vmatprep.subr.mxu0 0.0
    %279 = vmatpush1.msra.mxu0 0.0
    %280 = vmatprep.subr.mxu0 0.0
    %281 = vmatpush1.msra.mxu0 0.0
    %282 = vmatprep.subr.mxu0 0.0
    %283 = vmatpush1.msra.mxu0 0.0
    %284 = vmatprep.subr.mxu0 0.0
    %285 = vmatpush1.msra.mxu0 0.0
    %286 = vmatprep.subr.mxu0 0.0
    %287 = vmatpush1.msra.mxu0 0.0
    %288 = vmatprep.subr.mxu0 0.0
    %289 = vmatpush1.msra.mxu0 0.0
    %290 = vmatprep.subr.mxu0 0.0
    %291 = vmatpush1.msra.mxu0 0.0
    %292 = vmatprep.subr.mxu0 0.0
    %293 = vmatpush1.msra.mxu0 0.0
    %294 = vmatprep.subr.mxu0 0.0
    %295 = vmatpush1.msra.mxu0 0.0
    %296 = vmatprep.subr.mxu0 0.0
    %297 = vmatpush1.msra.mxu0 0.0
    %298 = vmatprep.mubr.f32.mxu0 0.0
    %299 = vmatmul.mubr.f32.gmra.mrb[0].mxu0 %v229
    %v300 = vpop.f32.mrb[0].mxu0
    %v301 = vadd.f32 %v226, %v300
    %v302 = vpop.f32.mrb[0].mxu0
    %303 = vdwg.mxu0
    %vm304 = vcmask 31744
    %305 = vst.msk [vmem:[%s7] sm:$0xff] %vm304, %v301
    // Predicated region
    $region34: #{tpu_custom_call.1} parent=1 // pred_check
      _
    $region35: #{tpu_custom_call.1} parent=1 // pred_check_branch
      %307 = sbr.rel (0) target = $region37
    $region36: #{tpu_custom_call.1} parent=1 // pred_region
      _
    $region37: #{tpu_custom_call.1} parent=1 // pred_fallthru
      _
    // Predicated region
    $region38: #{tpu_custom_call.1} parent=1 // pred_check
      _
    $region39: #{tpu_custom_call.1} parent=1 // pred_check_branch
      %309 = sbr.rel (0) target = $region41
    $region40: #{tpu_custom_call.1} parent=1 // pred_region
      _
    $region41: #{tpu_custom_call.1} parent=1 // pred_fallthru
      _
    %310 = vsyncpa [#allocation3], 1

</llo_original>
